<compile_context>
chip_gen: v6e
topology: v6e:2x2x1
jax: 0.10.0
libtpu: 0.0.40
codegen_flags: <defaults>
</compile_context>

<pallas_src>
import functools

import jax
import jax.numpy as jnp
from jax.experimental import pallas as pl
from jax.experimental.pallas import tpu as pltpu

# ---- "args" / synthetic tokenizer constants -------------------------------
TAU = 1.0
POS_EPS = 3.0   # defined in __init__, unused in forward
NEG_EPS = 1.0   # defined in __init__, unused in forward

PAD_ID, BOS_ID, SEP_ID, EOS_ID = 0, 1, 2, 3
ALL_SPECIAL_IDS = (PAD_ID, BOS_ID, SEP_ID, EOS_ID)

_NEG_BIG = -1e30  # finite "-inf" for padded vocab columns (keeps exp() clean)


# ======================= helpers ===========================================

def _round_up(x, m):
    return ((x + m - 1) // m) * m


def _vmem_budget_bytes():
    """Generation-aware VMEM budget (~75% of physical per-core VMEM)."""
    cap = 64 * 1024 * 1024                    # conservative fallback (v7x)
    try:
        info = pltpu.get_tpu_info()
        cap = int(getattr(info, "vmem_capacity_bytes", cap))
    except Exception:
        pass
    return max(int(cap * 0.75), 32 * 1024 * 1024)


_VMEM_BUDGET = _vmem_budget_bytes()


def _cast_bf16(x):
    return x if x.dtype == jnp.bfloat16 else x.astype(jnp.bfloat16)


# ======================= kernel 1: fused lm_head + CE + argmax =============

def _lmhead_ce_argmax_kernel(lab_ref, x_ref, w_ref, nll_ref, pred_ref,
                             m_ref, s_ref, tgt_ref, bmax_ref, bidx_ref,
                             *, valid_v):
    # grid = (row_tiles, vocab_tiles); vocab (j) is the innermost reduction.
    j = pl.program_id(1)
    nj = pl.num_programs(1)

    # --- init per-row online state at the first vocab tile -----------------
    @pl.when(j == 0)
    def _():
        m_ref[...] = jnp.full_like(m_ref, -jnp.inf)
        s_ref[...] = jnp.zeros_like(s_ref)
        tgt_ref[...] = jnp.zeros_like(tgt_ref)
        bmax_ref[...] = jnp.full_like(bmax_ref, -jnp.inf)
        bidx_ref[...] = jnp.zeros_like(bidx_ref)

    # --- full-H matmul for this (row, vocab) tile: no k-axis acc scratch ---
    logits = jnp.dot(x_ref[...], w_ref[...],
                     preferred_element_type=jnp.float32)          # (tm, tn)
    tm, tn = logits.shape
    labels = lab_ref[...]                                         # (tm, 1)
    col = j * tn + jax.lax.broadcasted_iota(jnp.int32, (tm, tn), 1)
    # mask padded vocab columns (V padded up to a multiple of tn)
    logits = jnp.where(col < valid_v, logits, _NEG_BIG)

    blk_max = jnp.max(logits, axis=-1, keepdims=True)             # (tm, 1)

    # online logsumexp
    m_old = m_ref[...]
    m_new = jnp.maximum(m_old, blk_max)
    s_ref[...] = s_ref[...] * jnp.exp(m_old - m_new) + jnp.sum(
        jnp.exp(logits - m_new), axis=-1, keepdims=True)
    m_ref[...] = m_new

    # target logit (only when the label column falls in this vocab tile)
    tgt_ref[...] += jnp.sum(jnp.where(col == labels, logits, 0.0),
                            axis=-1, keepdims=True)

    # online argmax (first-occurrence semantics: strict > keeps earlier tile,
    # in-tile ties resolved by min index among maxima)
    is_max = logits == blk_max
    blk_idx = jnp.min(jnp.where(is_max, col, jnp.int32(2147483647)),
                      axis=-1, keepdims=True)
    better = blk_max > bmax_ref[...]
    bidx_ref[...] = jnp.where(better, blk_idx, bidx_ref[...])
    bmax_ref[...] = jnp.maximum(bmax_ref[...], blk_max)

    # --- finalize: per-token NLL (ignore_index=-100) and predictions -------
    @pl.when(j == nj - 1)
    def _():
        nll = m_ref[...] + jnp.log(s_ref[...]) - tgt_ref[...]
        nll_ref[...] = jnp.where(labels == -100, 0.0, nll)
        pred_ref[...] = bidx_ref[...]


def fused_lm_head_ce_argmax(x, w, labels):
    """nll_per_token, argmax_preds = fused(x @ w, CE(labels), argmax).

    x: (M, H), w: (H, V) [ideally already bf16], labels: (M,) int32
    (-100 = ignore). lm_logits never materialize in HBM.
    """
    M, H = x.shape
    _, V = w.shape
    budget = _VMEM_BUDGET

    # tile targets: bigger row tiles amortize the dominant W stream
    big_vmem = budget > 56 * 1024 * 1024            # v5e/v6e vs v7x
    tm_target = 1024 if big_vmem else 512
    tn_target = 512

    # vocab tile + padding (keeps 256+-wide MXU tiles for any V)
    tn = min(tn_target, _round_up(V, 128))
    tn = _round_up(tn, 128)
    Vp = _round_up(V, tn)

    # row tile, shrunk until (double-buffered x + w + logits temps) fit VMEM
    tm = min(tm_target, _round_up(M, 16))
    tm = _round_up(tm, 16)

    def _cost(tm_):
        xb = tm_ * H * 2 * 2          # bf16 x block, double buffered
        wb = H * tn * 2 * 2           # bf16 w block, double buffered
        tmp = tm_ * tn * 4 * 3        # f32 logits + elementwise temporaries
        small = tm_ * 4 * 16          # labels/out/scratch columns
        return xb + wb + tmp + small

    while tm > 16 and _cost(tm) > budget:
        tm = max(16, _round_up(tm // 2, 16))
    Mp = _round_up(M, tm)

    xb = _cast_bf16(x)
    wb = _cast_bf16(w)
    if Mp != M:
        xb = jnp.pad(xb, ((0, Mp - M), (0, 0)))
        labels = jnp.pad(labels, ((0, Mp - M),), constant_values=-100)
    if Vp != V:
        wb = jnp.pad(wb, ((0, 0), (0, Vp - V)))
    labels2 = labels.reshape(Mp, 1).astype(jnp.int32)

    kernel = functools.partial(_lmhead_ce_argmax_kernel, valid_v=V)

    nll, preds = pl.pallas_call(
        kernel,
        out_shape=(jax.ShapeDtypeStruct((Mp, 1), jnp.float32),
                   jax.ShapeDtypeStruct((Mp, 1), jnp.int32)),
        grid_spec=pltpu.PrefetchScalarGridSpec(
            num_scalar_prefetch=0,
            grid=(Mp // tm, Vp // tn),
            in_specs=[pl.BlockSpec((tm, 1), lambda i, j: (i, 0)),
                      # x index map constant over j -> fetched once per row tile
                      pl.BlockSpec((tm, H), lambda i, j: (i, 0)),
                      pl.BlockSpec((H, tn), lambda i, j: (0, j))],
            out_specs=(pl.BlockSpec((tm, 1), lambda i, j: (i, 0)),
                       pl.BlockSpec((tm, 1), lambda i, j: (i, 0))),
            scratch_shapes=[pltpu.VMEM((tm, 1), jnp.float32),    # running max
                            pltpu.VMEM((tm, 1), jnp.float32),    # running sum
                            pltpu.VMEM((tm, 1), jnp.float32),    # target logit
                            pltpu.VMEM((tm, 1), jnp.float32),    # best logit
                            pltpu.VMEM((tm, 1), jnp.int32)]),    # best index
        compiler_params=pltpu.CompilerParams(
            dimension_semantics=("parallel", "arbitrary"),
            vmem_limit_bytes=budget),
    )(labels2, xb, wb)
    return nll[:M, 0], preds[:M, 0]


# ======================= kernel 2: fused projection + masked avg_pool ======

def _proj_pool_kernel(hs_ref, mask_ref, w_ref, b_ref, out_ref,
                      sum_ref, len_ref):
    # grid = (seq_tiles,): a masked-sum reduction over the sequence axis.
    si = pl.program_id(0)

    @pl.when(si == 0)
    def _():
        sum_ref[...] = jnp.zeros_like(sum_ref)
        len_ref[...] = jnp.zeros_like(len_ref)

    B, ts, H = hs_ref.shape
    h = hs_ref[...].reshape(B * ts, H)                         # bf16
    proj = jnp.dot(h, w_ref[...], preferred_element_type=jnp.float32)
    proj = jnp.maximum(proj + b_ref[...], 0.0).reshape(B, ts, H)

    m = mask_ref[...]                                          # (B, ts, 1) f32
    sum_ref[...] += jnp.sum(proj * m, axis=1)                  # masked sum
    len_ref[...] += jnp.sum(m, axis=1)                         # (B, 1)

    @pl.when(si == pl.num_programs(0) - 1)
    def _():
        # clamp avoids Inf/NaN for a fully-padded row (all-zero mask)
        out_ref[...] = sum_ref[...] / jnp.maximum(len_ref[...], 1.0)


def fused_proj_avg_pool(h, mask, w, b, *, ts_target=256):
    """avg = masked_avg_pool(ReLU(h @ W + b), mask) for one stream."""
    B, S, H = h.shape
    budget = _VMEM_BUDGET

    # seq tile: double-buffered bf16 activation block <= ~40% of VMEM budget
    max_ts = int(0.4 * budget) // max(1, 2 * B * H * 2)
    max_ts = max(16, (max_ts // 16) * 16)
    ts = min(ts_target, max_ts, _round_up(S, 16))
    ts = max(16, (ts // 16) * 16)
    Sp = _round_up(S, ts)

    hb = _cast_bf16(h)                       # halve the dominant DMA stream
    m3 = mask.astype(jnp.float32)[..., None]  # (B, S, 1): flexible seq tiling
    if Sp != S:
        hb = jnp.pad(hb, ((0, 0), (0, Sp - S), (0, 0)))
        m3 = jnp.pad(m3, ((0, 0), (0, Sp - S), (0, 0)))

    wb = _cast_bf16(w)
    b2 = b.reshape(1, H).astype(jnp.float32)

    out = pl.pallas_call(
        _proj_pool_kernel,
        out_shape=jax.ShapeDtypeStruct((B, H), jnp.float32),
        grid_spec=pltpu.PrefetchScalarGridSpec(
            num_scalar_prefetch=0,
            grid=(Sp // ts,),
            in_specs=[pl.BlockSpec((B, ts, H), lambda si: (0, si, 0)),
                      pl.BlockSpec((B, ts, 1), lambda si: (0, si, 0)),
                      pl.BlockSpec((H, H), lambda si: (0, 0)),
                      pl.BlockSpec((1, H), lambda si: (0, 0))],
            out_specs=pl.BlockSpec((B, H), lambda si: (0, 0)),
            scratch_shapes=[pltpu.VMEM((B, H), jnp.float32),
                            pltpu.VMEM((B, 1), jnp.float32)]),
        compiler_params=pltpu.CompilerParams(
            dimension_semantics=("arbitrary",),
            vmem_limit_bytes=budget),
    )(hb, m3, wb, b2)
    return out


# ======================= kernel 3: fused cosine-sim + mask + contrastive CE =

def _cont_loss_kernel(doc_ref, abs_ref, mask_ref, nll_ref):
    a = doc_ref[...].astype(jnp.float32)                   # (B, H)
    b = abs_ref[...].astype(jnp.float32)                   # (B, H)
    dots = jax.lax.dot_general(a, b, (((1,), (1,)), ((), ())),
                               preferred_element_type=jnp.float32)  # (B, B)
    na = jnp.sqrt(jnp.sum(a * a, axis=-1, keepdims=True))  # (B, 1)
    nb = jnp.sqrt(jnp.sum(b * b, axis=-1, keepdims=True))  # (B, 1)
    denom = jnp.maximum(na * nb.reshape(1, -1), 1e-8)
    sim = dots / denom
    sim = jnp.where(mask_ref[...] > 0.5, -jnp.inf, sim)
    logits = sim / TAU

    Bn = logits.shape[0]
    row = jax.lax.broadcasted_iota(jnp.int32, (Bn, Bn), 0)
    col = jax.lax.broadcasted_iota(jnp.int32, (Bn, Bn), 1)
    m = jnp.max(logits, axis=-1, keepdims=True)
    lse = m + jnp.log(jnp.sum(jnp.exp(logits - m), axis=-1, keepdims=True))
    tgt = jnp.sum(jnp.where(row == col, logits, 0.0), axis=-1, keepdims=True)
    nll_ref[...] = lse - tgt                                # labels = arange(B)


def fused_contrastive_loss(avg_doc, avg_abs, attn_mask_bb):
    B, H = avg_doc.shape
    nll = pl.pallas_call(
        _cont_loss_kernel,
        out_shape=jax.ShapeDtypeStruct((B, 1), jnp.float32),
        grid=(1,),
        in_specs=[pl.BlockSpec((B, H), lambda i: (0, 0)),
                  pl.BlockSpec((B, H), lambda i: (0, 0)),
                  pl.BlockSpec((B, B), lambda i: (0, 0))],
        out_specs=pl.BlockSpec((B, 1), lambda i: (0, 0)),
    )(avg_doc, avg_abs, attn_mask_bb.astype(jnp.float32))
    return jnp.mean(nll)


# ======================= JAX glue (forward pass) ===========================

def shift_right(labels):
    shifted = jnp.zeros_like(labels)
    shifted = shifted.at[:, 1:].set(labels[:, :-1])
    shifted = shifted.at[:, 0].set(BOS_ID)
    shifted = jnp.where(shifted == -100, PAD_ID, shifted)
    return shifted


def adv_contrastive_nmt_forward(params, input_ids, attention_mask, lm_labels,
                                adv=True):
    emb = params["emb"]          # (V, H)
    # pre-cast bf16 weight copies if provided (avoids a per-call cast pass)
    w_lm = params.get("lm_head_bf16", params["lm_head"])     # (H, V)
    w_p = params.get("proj_w_bf16", params["proj_w"])        # (H, H)
    b_p = params["proj_b"]                                   # (H,)
    V, H = emb.shape
    B, S = input_ids.shape
    _, T = lm_labels.shape

    # TODO(synk): the full pretrained T5 encoder/decoder stacks are external
    # modules; deterministic embedding-based stand-ins produce the encoder
    # hidden states and decoder sequence output here.
    hidden_states = emb[input_ids]                                   # (B,S,H)
    decoder_input_ids = shift_right(lm_labels)
    decoder_attention_mask = jnp.sign(decoder_input_ids).at[:, 0].set(1)
    seq_out_raw = emb[decoder_input_ids] + 0.05 * jnp.mean(
        hidden_states, axis=1, keepdims=True)                        # (B,T,H)
    sequence_output = seq_out_raw * (float(H) ** -0.5)

    # single bf16 casts of activations shared by kernels 1 & 2
    seq_bf16 = sequence_output.astype(jnp.bfloat16)
    enc_bf16 = hidden_states.astype(jnp.bfloat16)

    # fused lm_head matmul + per-token CE + argmax (lm_logits stays in VMEM)
    nll_tok, preds_flat = fused_lm_head_ce_argmax(
        seq_bf16.reshape(B * T, H), w_lm, lm_labels.reshape(-1))

    # update_frequency(lm_labels): count tokens after the sep token, skipping
    # special ids and -100 (stateful host numpy in the original; done in JAX)
    sep_pos = jnp.argmax(lm_labels == SEP_ID, axis=1)
    pos = jnp.arange(T)[None, :]
    after_sep = pos > sep_pos[:, None]
    specials = jnp.array(ALL_SPECIAL_IDS, jnp.int32)
    is_special = (lm_labels[..., None] == specials).any(-1) | (lm_labels == -100)
    count_mask = (after_sep & ~is_special).astype(jnp.float32)
    safe_idx = jnp.where(lm_labels < 0, 0, lm_labels)
    word_freq = jnp.zeros((V,), jnp.float32).at[safe_idx.reshape(-1)].add(
        count_mask.reshape(-1))

    freq_pred = word_freq[preds_flat]
    gt_idx = lm_labels.reshape(-1)
    # deliberate reproduction of numpy negative-indexing for -100 labels
    gt_idx = jnp.where(gt_idx < 0, gt_idx + V, gt_idx)
    freq_gt = word_freq[gt_idx]
    total_freq = jnp.sum(word_freq)
    weight = 1.0 + jnp.maximum(freq_pred - freq_gt, 0.0) / total_freq
    nll = jnp.dot(nll_tok, weight)

    if not adv:
        return nll

    # contrastive branch: one fused projection+avg_pool call per stream
    avg_doc = fused_proj_avg_pool(enc_bf16, attention_mask, w_p, b_p)
    avg_abs = fused_proj_avg_pool(seq_bf16, decoder_attention_mask, w_p, b_p)

    input_check = (input_ids[None, :, :] - input_ids[:, None, :]).sum(-1)
    attn_mask_bb = (input_check == 0).astype(jnp.int32) - jnp.eye(B, dtype=jnp.int32)

    # fused cosine-sim + -inf masking + contrastive CE
    cont_loss = fused_contrastive_loss(avg_doc, avg_abs, attn_mask_bb)
    return nll, cont_loss


# ======================= demo ==============================================

if __name__ == "__main__":
    B, S, T, H, V = 2, 8, 8, 32, 128

    key = jax.random.PRNGKey(0)
    k1, k2, k3, k4, k5, k6 = jax.random.split(key, 6)

    params = {
        "emb":     jax.random.normal(k1, (V, H), jnp.float32) * 0.05,
        "lm_head": jax.random.normal(k2, (H, V), jnp.float32) * 0.05,
        "proj_w":  jax.random.normal(k3, (H, H), jnp.float32) * 0.05,
        "proj_b":  jax.random.normal(k6, (H,), jnp.float32) * 0.01,
    }
    # persist bf16 weight copies once (steady-state forward pays no cast)
    params["lm_head_bf16"] = params["lm_head"].astype(jnp.bfloat16)
    params["proj_w_bf16"] = params["proj_w"].astype(jnp.bfloat16)

    input_ids = jax.random.randint(k4, (B, S), 4, V, dtype=jnp.int32)
    attention_mask = jnp.ones((B, S), jnp.int32).at[1, -2:].set(0)

    lm_labels = jax.random.randint(k5, (B, T), 4, V, dtype=jnp.int32)
    lm_labels = lm_labels.at[:, 2].set(SEP_ID)       # sep token present per row
    lm_labels = lm_labels.at[:, -1].set(-100)        # exercise ignore_index

    nll, cont_loss = adv_contrastive_nmt_forward(
        params, input_ids, attention_mask, lm_labels, adv=True)
    jax.block_until_ready((nll, cont_loss))
    print("KERNEL_OK")
</pallas_src>

<mosaic_0001>
module attributes {stable_mosaic.version = 11 : i64} {
  func.func @_lmhead_ce_argmax_kernel(%arg0: i32, %arg1: i32, %arg2: memref<16x1xi32, #tpu.memory_space<vmem>>, %arg3: memref<16x32xbf16, #tpu.memory_space<vmem>>, %arg4: memref<32x128xbf16, #tpu.memory_space<vmem>>, %arg5: memref<16x1xf32, #tpu.memory_space<vmem>>, %arg6: memref<16x1xi32, #tpu.memory_space<vmem>>, %arg7: memref<16x1xf32, #tpu.memory_space<vmem>>, %arg8: memref<16x1xf32, #tpu.memory_space<vmem>>, %arg9: memref<16x1xf32, #tpu.memory_space<vmem>>, %arg10: memref<16x1xf32, #tpu.memory_space<vmem>>, %arg11: memref<16x1xi32, #tpu.memory_space<vmem>>) attributes {dimension_semantics = [#tpu.dimension_semantics<parallel>, #tpu.dimension_semantics<arbitrary>], iteration_bounds = array<i64: 1, 1>, scalar_prefetch = 0 : i64, scratch_operands = 5 : i64, tpu.core_type = #tpu.core_type<tc>, window_params = [{transform_indices = @transform_0, window_bounds = array<i64: 16, 1>}, {transform_indices = @transform_1, window_bounds = array<i64: 16, 32>}, {transform_indices = @transform_2, window_bounds = array<i64: 32, 128>}, {transform_indices = @transform_3, window_bounds = array<i64: 16, 1>}, {transform_indices = @transform_4, window_bounds = array<i64: 16, 1>}]} {
    %c0_i32 = arith.constant 0 : i32
    %0 = arith.cmpi eq, %arg1, %c0_i32 : i32
    %1 = arith.extui %0 : i1 to i32
    %c0_i32_0 = arith.constant 0 : i32
    %2 = arith.cmpi ne, %1, %c0_i32_0 : i32
    scf.if %2 {
      %cst_37 = arith.constant 0xFF800000 : f32
      %57 = vector.broadcast %cst_37 : f32 to vector<16x1xf32>
      %c0_38 = arith.constant 0 : index
      %c0_39 = arith.constant 0 : index
      %58 = vector.load %arg7[%c0_38, %c0_39] : memref<16x1xf32, #tpu.memory_space<vmem>>, vector<16x1xf32>
      tpu.vector_store %arg7[%c0_38, %c0_39], %57 {strides = array<i32>} : memref<16x1xf32, #tpu.memory_space<vmem>>, vector<16x1xf32>,
      %cst_40 = arith.constant 0.000000e+00 : f32
      %59 = vector.broadcast %cst_40 : f32 to vector<16x1xf32>
      %c0_41 = arith.constant 0 : index
      %c0_42 = arith.constant 0 : index
      %60 = vector.load %arg8[%c0_41, %c0_42] : memref<16x1xf32, #tpu.memory_space<vmem>>, vector<16x1xf32>
      tpu.vector_store %arg8[%c0_41, %c0_42], %59 {strides = array<i32>} : memref<16x1xf32, #tpu.memory_space<vmem>>, vector<16x1xf32>,
      %cst_43 = arith.constant 0.000000e+00 : f32
      %61 = vector.broadcast %cst_43 : f32 to vector<16x1xf32>
      %c0_44 = arith.constant 0 : index
      %c0_45 = arith.constant 0 : index
      %62 = vector.load %arg9[%c0_44, %c0_45] : memref<16x1xf32, #tpu.memory_space<vmem>>, vector<16x1xf32>
      tpu.vector_store %arg9[%c0_44, %c0_45], %61 {strides = array<i32>} : memref<16x1xf32, #tpu.memory_space<vmem>>, vector<16x1xf32>,
      %cst_46 = arith.constant 0xFF800000 : f32
      %63 = vector.broadcast %cst_46 : f32 to vector<16x1xf32>
      %c0_47 = arith.constant 0 : index
      %c0_48 = arith.constant 0 : index
      %64 = vector.load %arg10[%c0_47, %c0_48] : memref<16x1xf32, #tpu.memory_space<vmem>>, vector<16x1xf32>
      tpu.vector_store %arg10[%c0_47, %c0_48], %63 {strides = array<i32>} : memref<16x1xf32, #tpu.memory_space<vmem>>, vector<16x1xf32>,
      %c0_i32_49 = arith.constant 0 : i32
      %65 = vector.broadcast %c0_i32_49 : i32 to vector<16x1xi32>
      %c0_50 = arith.constant 0 : index
      %c0_51 = arith.constant 0 : index
      %66 = vector.load %arg11[%c0_50, %c0_51] : memref<16x1xi32, #tpu.memory_space<vmem>>, vector<16x1xi32>
      tpu.vector_store %arg11[%c0_50, %c0_51], %65 {strides = array<i32>} : memref<16x1xi32, #tpu.memory_space<vmem>>, vector<16x1xi32>,
    } else {
    }
    %c0 = arith.constant 0 : index
    %c0_1 = arith.constant 0 : index
    %3 = vector.load %arg3[%c0, %c0_1] : memref<16x32xbf16, #tpu.memory_space<vmem>>, vector<16x32xbf16>
    %c0_2 = arith.constant 0 : index
    %c0_3 = arith.constant 0 : index
    %4 = vector.load %arg4[%c0_2, %c0_3] : memref<32x128xbf16, #tpu.memory_space<vmem>>, vector<32x128xbf16>
    %cst = arith.constant dense<0.000000e+00> : vector<16x128xf32>
    %5 = tpu.matmul %3, %4, %cst {dimension_numbers = #tpu.dot_dimension_numbers<[1], [0], [0], [1], [0, 0, 1, 1], [], []>} : vector<16x32xbf16>, vector<32x128xbf16>, vector<16x128xf32> -> vector<16x128xf32>
    %c0_4 = arith.constant 0 : index
    %c0_5 = arith.constant 0 : index
    %6 = vector.load %arg2[%c0_4, %c0_5] : memref<16x1xi32, #tpu.memory_space<vmem>>, vector<16x1xi32>
    %c128_i32 = arith.constant 128 : i32
    %7 = arith.muli %arg1, %c128_i32 : i32
    %8 = tpu.iota {dimensions = array<i32: 1>} : vector<16x128xi32>
    %9 = vector.broadcast %7 : i32 to vector<16x128xi32>
    %10 = arith.addi %9, %8 : vector<16x128xi32>
    %c128_i32_6 = arith.constant 128 : i32
    %11 = vector.broadcast %c128_i32_6 : i32 to vector<16x128xi32>
    %12 = arith.cmpi slt, %10, %11 : vector<16x128xi32>
    %cst_7 = arith.constant -1.000000e+30 : f32
    %13 = vector.broadcast %cst_7 : f32 to vector<16x128xf32>
    %14 = arith.select %12, %5, %13 : vector<16x128xi1>, vector<16x128xf32>
    %cst_8 = arith.constant dense<0xFF800000> : vector<16xf32>
    %15 = vector.multi_reduction <maximumf>, %14, %cst_8 [1] : vector<16x128xf32> to vector<16xf32>
    %16 = vector.shape_cast %15 : vector<16xf32> to vector<16x1xf32>
    %c0_9 = arith.constant 0 : index
    %c0_10 = arith.constant 0 : index
    %17 = vector.load %arg7[%c0_9, %c0_10] : memref<16x1xf32, #tpu.memory_space<vmem>>, vector<16x1xf32>
    %18 = arith.maximumf %17, %16 : vector<16x1xf32>
    %c0_11 = arith.constant 0 : index
    %c0_12 = arith.constant 0 : index
    %19 = vector.load %arg8[%c0_11, %c0_12] : memref<16x1xf32, #tpu.memory_space<vmem>>, vector<16x1xf32>
    %20 = arith.subf %17, %18 : vector<16x1xf32>
    %21 = math.exp %20 : vector<16x1xf32>
    %22 = arith.mulf %19, %21 : vector<16x1xf32>
    %23 = vector.broadcast %18 : vector<16x1xf32> to vector<16x128xf32>
    %24 = arith.subf %14, %23 : vector<16x128xf32>
    %25 = math.exp %24 : vector<16x128xf32>
    %cst_13 = arith.constant dense<0.000000e+00> : vector<16xf32>
    %26 = vector.multi_reduction <add>, %25, %cst_13 [1] : vector<16x128xf32> to vector<16xf32>
    %27 = vector.shape_cast %26 : vector<16xf32> to vector<16x1xf32>
    %28 = arith.addf %22, %27 : vector<16x1xf32>
    %c0_14 = arith.constant 0 : index
    %c0_15 = arith.constant 0 : index
    %29 = vector.load %arg8[%c0_14, %c0_15] : memref<16x1xf32, #tpu.memory_space<vmem>>, vector<16x1xf32>
    tpu.vector_store %arg8[%c0_14, %c0_15], %28 {strides = array<i32>} : memref<16x1xf32, #tpu.memory_space<vmem>>, vector<16x1xf32>,
    %c0_16 = arith.constant 0 : index
    %c0_17 = arith.constant 0 : index
    %30 = vector.load %arg7[%c0_16, %c0_17] : memref<16x1xf32, #tpu.memory_space<vmem>>, vector<16x1xf32>
    tpu.vector_store %arg7[%c0_16, %c0_17], %18 {strides = array<i32>} : memref<16x1xf32, #tpu.memory_space<vmem>>, vector<16x1xf32>,
    %c0_18 = arith.constant 0 : index
    %c0_19 = arith.constant 0 : index
    %31 = vector.load %arg9[%c0_18, %c0_19] : memref<16x1xf32, #tpu.memory_space<vmem>>, vector<16x1xf32>
    %32 = vector.broadcast %6 : vector<16x1xi32> to vector<16x128xi32>
    %33 = arith.cmpi eq, %10, %32 : vector<16x128xi32>
    %cst_20 = arith.constant 0.000000e+00 : f32
    %34 = vector.broadcast %cst_20 : f32 to vector<16x128xf32>
    %35 = arith.select %33, %14, %34 : vector<16x128xi1>, vector<16x128xf32>
    %cst_21 = arith.constant dense<0.000000e+00> : vector<16xf32>
    %36 = vector.multi_reduction <add>, %35, %cst_21 [1] : vector<16x128xf32> to vector<16xf32>
    %37 = vector.shape_cast %36 : vector<16xf32> to vector<16x1xf32>
    %38 = arith.addf %31, %37 : vector<16x1xf32>
    %c0_22 = arith.constant 0 : index
    %c0_23 = arith.constant 0 : index
    %39 = vector.load %arg9[%c0_22, %c0_23] : memref<16x1xf32, #tpu.memory_space<vmem>>, vector<16x1xf32>
    tpu.vector_store %arg9[%c0_22, %c0_23], %38 {strides = array<i32>} : memref<16x1xf32, #tpu.memory_space<vmem>>, vector<16x1xf32>,
    %40 = vector.broadcast %16 : vector<16x1xf32> to vector<16x128xf32>
    %41 = arith.cmpf oeq, %14, %40 : vector<16x128xf32>
    %c2147483647_i32 = arith.constant 2147483647 : i32
    %42 = vector.broadcast %c2147483647_i32 : i32 to vector<16x128xi32>
    %43 = arith.select %41, %10, %42 : vector<16x128xi1>, vector<16x128xi32>
    %cst_24 = arith.constant dense<2147483647> : vector<16xi32>
    %44 = vector.multi_reduction <minsi>, %43, %cst_24 [1] : vector<16x128xi32> to vector<16xi32>
    %45 = vector.shape_cast %44 : vector<16xi32> to vector<16x1xi32>
    %c0_25 = arith.constant 0 : index
    %c0_26 = arith.constant 0 : index
    %46 = vector.load %arg10[%c0_25, %c0_26] : memref<16x1xf32, #tpu.memory_space<vmem>>, vector<16x1xf32>
    %47 = arith.cmpf ogt, %16, %46 : vector<16x1xf32>
    %c0_27 = arith.constant 0 : index
    %c0_28 = arith.constant 0 : index
    %48 = vector.load %arg11[%c0_27, %c0_28] : memref<16x1xi32, #tpu.memory_space<vmem>>, vector<16x1xi32>
    %49 = arith.select %47, %45, %48 : vector<16x1xi1>, vector<16x1xi32>
    %c0_29 = arith.constant 0 : index
    %c0_30 = arith.constant 0 : index
    %50 = vector.load %arg11[%c0_29, %c0_30] : memref<16x1xi32, #tpu.memory_space<vmem>>, vector<16x1xi32>
    tpu.vector_store %arg11[%c0_29, %c0_30], %49 {strides = array<i32>} : memref<16x1xi32, #tpu.memory_space<vmem>>, vector<16x1xi32>,
    %c0_31 = arith.constant 0 : index
    %c0_32 = arith.constant 0 : index
    %51 = vector.load %arg10[%c0_31, %c0_32] : memref<16x1xf32, #tpu.memory_space<vmem>>, vector<16x1xf32>
    %52 = arith.maximumf %51, %16 : vector<16x1xf32>
    %c0_33 = arith.constant 0 : index
    %c0_34 = arith.constant 0 : index
    %53 = vector.load %arg10[%c0_33, %c0_34] : memref<16x1xf32, #tpu.memory_space<vmem>>, vector<16x1xf32>
    tpu.vector_store %arg10[%c0_33, %c0_34], %52 {strides = array<i32>} : memref<16x1xf32, #tpu.memory_space<vmem>>, vector<16x1xf32>,
    %c0_i32_35 = arith.constant 0 : i32
    %54 = arith.cmpi eq, %arg1, %c0_i32_35 : i32
    %55 = arith.extui %54 : i1 to i32
    %c0_i32_36 = arith.constant 0 : i32
    %56 = arith.cmpi ne, %55, %c0_i32_36 : i32
    scf.if %56 {
      %c0_37 = arith.constant 0 : index
      %c0_38 = arith.constant 0 : index
      %57 = vector.load %arg7[%c0_37, %c0_38] : memref<16x1xf32, #tpu.memory_space<vmem>>, vector<16x1xf32>
      %c0_39 = arith.constant 0 : index
      %c0_40 = arith.constant 0 : index
      %58 = vector.load %arg8[%c0_39, %c0_40] : memref<16x1xf32, #tpu.memory_space<vmem>>, vector<16x1xf32>
      %59 = math.log %58 : vector<16x1xf32>
      %60 = arith.addf %57, %59 : vector<16x1xf32>
      %c0_41 = arith.constant 0 : index
      %c0_42 = arith.constant 0 : index
      %61 = vector.load %arg9[%c0_41, %c0_42] : memref<16x1xf32, #tpu.memory_space<vmem>>, vector<16x1xf32>
      %62 = arith.subf %60, %61 : vector<16x1xf32>
      %c-100_i32 = arith.constant -100 : i32
      %63 = vector.broadcast %c-100_i32 : i32 to vector<16x1xi32>
      %64 = arith.cmpi eq, %6, %63 : vector<16x1xi32>
      %cst_43 = arith.constant 0.000000e+00 : f32
      %65 = vector.broadcast %cst_43 : f32 to vector<16x1xf32>
      %66 = arith.select %64, %65, %62 : vector<16x1xi1>, vector<16x1xf32>
      %c0_44 = arith.constant 0 : index
      %c0_45 = arith.constant 0 : index
      %67 = vector.load %arg5[%c0_44, %c0_45] : memref<16x1xf32, #tpu.memory_space<vmem>>, vector<16x1xf32>
      tpu.vector_store %arg5[%c0_44, %c0_45], %66 {strides = array<i32>} : memref<16x1xf32, #tpu.memory_space<vmem>>, vector<16x1xf32>,
      %c0_46 = arith.constant 0 : index
      %c0_47 = arith.constant 0 : index
      %68 = vector.load %arg11[%c0_46, %c0_47] : memref<16x1xi32, #tpu.memory_space<vmem>>, vector<16x1xi32>
      %c0_48 = arith.constant 0 : index
      %c0_49 = arith.constant 0 : index
      %69 = vector.load %arg6[%c0_48, %c0_49] : memref<16x1xi32, #tpu.memory_space<vmem>>, vector<16x1xi32>
      tpu.vector_store %arg6[%c0_48, %c0_49], %68 {strides = array<i32>} : memref<16x1xi32, #tpu.memory_space<vmem>>, vector<16x1xi32>,
    } else {
    }
    return
  }
  func.func @transform_0(%arg0: i32, %arg1: i32) -> (i32, i32) {
    %c0_i32 = arith.constant 0 : i32
    %c0_i32_0 = arith.constant 0 : i32
    return %arg0, %c0_i32 : i32, i32
  }
  func.func @transform_1(%arg0: i32, %arg1: i32) -> (i32, i32) {
    %c0_i32 = arith.constant 0 : i32
    %c0_i32_0 = arith.constant 0 : i32
    return %arg0, %c0_i32 : i32, i32
  }
  func.func @transform_2(%arg0: i32, %arg1: i32) -> (i32, i32) {
    %c0_i32 = arith.constant 0 : i32
    %c0_i32_0 = arith.constant 0 : i32
    return %c0_i32, %arg1 : i32, i32
  }
  func.func @transform_3(%arg0: i32, %arg1: i32) -> (i32, i32) {
    %c0_i32 = arith.constant 0 : i32
    %c0_i32_0 = arith.constant 0 : i32
    return %arg0, %c0_i32 : i32, i32
  }
  func.func @transform_4(%arg0: i32, %arg1: i32) -> (i32, i32) {
    %c0_i32 = arith.constant 0 : i32
    %c0_i32_0 = arith.constant 0 : i32
    return %arg0, %c0_i32 : i32, i32
  }
}

</mosaic_0001>

<llo_original>
// kernel: tpu_custom_call.1
$region0: #{tpu_custom_call.1}
  #allocation0 [shape = 'u32[]', space=smem, size = 0x4, offset = 0x4, fixed_abs, tag = 'smem constant byte address 0x4 - core index']
  #allocation1 [shape = 'u32[144,128]{1,0:T(1,128)}', space=vmem, size = 0x12000, scoped, tag = 'internal scratch']
  #allocation2 [shape = 'f32[16,1]{1,0:T(8,128)}', space=vmem, size = 0x2000, scoped, tag = 'scratch operand']
  #allocation3 [shape = 'f32[16,1]{1,0:T(8,128)}', space=vmem, size = 0x2000, scoped, tag = 'scratch operand']
  #allocation4 [shape = 'f32[16,1]{1,0:T(8,128)}', space=vmem, size = 0x2000, scoped, tag = 'scratch operand']
  #allocation5 [shape = 'f32[16,1]{1,0:T(8,128)}', space=vmem, size = 0x2000, scoped, tag = 'scratch operand']
  #allocation6 [shape = 's32[16,1]{1,0:T(8,128)}', space=vmem, size = 0x2000, scoped, tag = 'scratch operand']
  %s0 = inlined_call_operand.vmem [shape: s32[16,1], index: 0, kind: input, shape index: {}]
  %s1 = inlined_call_operand.hbm [shape: bf16[16,32], index: 1, kind: input, shape index: {}]
  %s2 = inlined_call_operand.vmem [shape: bf16[32,128], index: 2, kind: input, shape index: {}]
  %s3 = inlined_call_operand.vmem [shape: f32[16,1], index: 3, kind: output, shape index: {0}]
  %s4 = inlined_call_operand.vmem [shape: s32[16,1], index: 4, kind: output, shape index: {1}]
  %5 = xla_tuple %s3, %s4
  %s6 = sld [smem:[#allocation0]]
  $region42: #{tpu_custom_call.1} parent=0
    _
  %s8 = ssub.s32 1, %s6
  %s9 = scalar_select 0, %s8, %s6
  $region1: #{tpu_custom_call.1} parent=0
    #allocation7 [shape = 'u8[4096]{0}', space=vmem, size = 0x1000, scoped, tag = 'input window, operand 1, single buffered']
    #allocation8 [shape = 's32[1]{0}', space=sflag, size = 0x4, scoped, tag = 'scoped memory for tpu_custom_call.1']
    %10 = vsyncpa [#allocation8], 0
    // Predicated region
    $region2: #{tpu_custom_call.1} parent=1 // pred_check
      _
    $region3: #{tpu_custom_call.1} parent=1 // pred_check_branch
      %12 = sbr.rel (0) target = $region5
    $region4: #{tpu_custom_call.1} parent=1 // pred_region
      _
    $region5: #{tpu_custom_call.1} parent=1 // pred_fallthru
      _
    // Predicated region
    $region6: #{tpu_custom_call.1} parent=1 // pred_check
      _
    $region7: #{tpu_custom_call.1} parent=1 // pred_check_branch
      %14 = sbr.rel (0) target = $region9
    $region8: #{tpu_custom_call.1} parent=1 // pred_region
      %s16 = ssub.s32 128, 128
      %17 = vsyncadd [#allocation8], %s16
      %s18 = sshll.u32 [#allocation7], 4
      %s19 = int_to_ptr.vmem [resolvable:$true] %s18
      %24 = dma.hbm_to_vmem [thread:$0]  %s1, 128, %s19, [#allocation8], 64, 64, 4
    $region9: #{tpu_custom_call.1} parent=1 // pred_fallthru
      _
    // Predicated region
    $region10: #{tpu_custom_call.1} parent=1 // pred_check
      _
    $region11: #{tpu_custom_call.1} parent=1 // pred_check_branch
      %26 = sbr.rel (0) target = $region13
    $region12: #{tpu_custom_call.1} parent=1 // pred_region
      _
    $region13: #{tpu_custom_call.1} parent=1 // pred_fallthru
      _
    // Predicated region
    $region14: #{tpu_custom_call.1} parent=1 // pred_check
      _
    $region15: #{tpu_custom_call.1} parent=1 // pred_check_branch
      %28 = sbr.rel (0) target = $region17
    $region16: #{tpu_custom_call.1} parent=1 // pred_region
      %29 = dma.done [#allocation8], 128
    $region17: #{tpu_custom_call.1} parent=1 // pred_fallthru
      _
    %p31 = scmp.eq.s32.totalorder 0, 0
    // Predicated region
    $region18: #{tpu_custom_call.1} parent=1 // pred_check
      %p32 = pneg %p31
    $region19: #{tpu_custom_call.1} parent=1 // pred_check_branch
      %34 = sbr.rel (%p32) target = $region21
    $region20: #{tpu_custom_call.1} parent=1 // pred_region
      %vm35 = vcmask 7168
      %36 = vst.msk [vmem:[#allocation2] sm:$0xff] %vm35, -inf
      %37 = vst.msk [vmem:[#allocation2 + $0x8] sm:$0xff] %vm35, -inf
      %38 = vst.msk [vmem:[#allocation3] sm:$0xff] %vm35, 0.0
      %39 = vst.msk [vmem:[#allocation3 + $0x8] sm:$0xff] %vm35, 0.0
      %40 = vst.msk [vmem:[#allocation4] sm:$0xff] %vm35, 0.0
      %41 = vst.msk [vmem:[#allocation4 + $0x8] sm:$0xff] %vm35, 0.0
      %42 = vst.msk [vmem:[#allocation5] sm:$0xff] %vm35, -inf
      %43 = vst.msk [vmem:[#allocation5 + $0x8] sm:$0xff] %vm35, -inf
      %44 = vst.msk [vmem:[#allocation6] sm:$0xff] %vm35, 0
      %45 = vst.msk [vmem:[#allocation6 + $0x8] sm:$0xff] %vm35, 0
    $region21: #{tpu_custom_call.1} parent=1 // pred_fallthru
      _
    %v46 = vld [vmem:[#allocation7] sm:$0xf]
    %v47 = vld [vmem:[#allocation7 + $0x4] sm:$0xf]
    %v48 = vld [vmem:[%s2] sm:$0xf]
    %v49 = vld [vmem:[%s2 + $0x4] sm:$0xf]
    %v50 = vld [vmem:[%s2 + $0x8] sm:$0xf]
    %v51 = vld [vmem:[%s2 + $0xc] sm:$0xf]
    %v54 = vunpack.c.l.b16 %v46
    %v55 = vunpack.c.l.b16 %v47
    %v56 = vpack.c.b16 %v55, %v54
    %v61 = vunpack.c.l.b16 %v48
    %v62 = vunpack.c.l.b16 %v49
    %v63 = vunpack.c.l.b16 %v50
    %v64 = vunpack.c.l.b16 %v51
    %v65 = vpack.c.b16 %v62, %v61
    %v66 = vpack.c.b16 %v64, %v63
    %vm69 = vcmask 261120
    %v71 = vsel %vm69, %v56, 0
    %73 = vmatprep.subr.bf16.mxu0 0
    %74 = vmatpush1.bf16.msra.mxu0 0
    %75 = vmatprep.subr.bf16.mxu0 0
    %76 = vmatpush1.bf16.msra.mxu0 0
    %77 = vmatprep.subr.bf16.mxu0 0
    %78 = vmatpush1.bf16.msra.mxu0 0
    %79 = vmatprep.subr.bf16.mxu0 0
    %80 = vmatpush1.bf16.msra.mxu0 0
    %81 = vmatprep.subr.bf16.mxu0 0
    %82 = vmatpush1.bf16.msra.mxu0 0
    %83 = vmatprep.subr.bf16.mxu0 0
    %84 = vmatpush1.bf16.msra.mxu0 0
    %85 = vmatprep.subr.bf16.mxu0 0
    %86 = vmatpush1.bf16.msra.mxu0 %v66
    %87 = vmatprep.subr.bf16.mxu0 0
    %88 = vmatpush1.bf16.msra.mxu0 %v65
    %89 = vmatprep.subr.bf16.mxu0 0
    %90 = vmatpush2.bf16.msra.mxu0 0
    %91 = vmatprep.subr.bf16.mxu0 0
    %92 = vmatpush2.bf16.msra.mxu0 0
    %93 = vmatprep.subr.bf16.mxu0 0
    %94 = vmatpush2.bf16.msra.mxu0 0
    %95 = vmatprep.subr.bf16.mxu0 0
    %96 = vmatpush2.bf16.msra.mxu0 0
    %97 = vmatprep.subr.bf16.mxu0 0
    %98 = vmatpush2.bf16.msra.mxu0 0
    %99 = vmatprep.subr.bf16.mxu0 0
    %100 = vmatpush2.bf16.msra.mxu0 0
    %101 = vmatprep.subr.bf16.mxu0 0
    %102 = vmatpush2.bf16.msra.mxu0 0
    %103 = vmatprep.subr.bf16.mxu0 0
    %104 = vmatpush2.bf16.msra.mxu0 0
    %105 = vmatprep.mubr.bf16.mxu0 0
    %106 = vmatmul.mubr.bf16.gmra.mxu0 %v71
    %v107 = vpop.f32.mrf.mxu0
    %v108 = vadd.f32 0.0, %v107
    %v109 = vpop.f32.mrf.mxu0
    %v110 = vpop.f32.mrf.mxu0
    %v111 = vadd.f32 0.0, %v110
    %v112 = vpop.f32.mrf.mxu0
    %113 = vdwg.mxu0
    %v114 = vld [vmem:[%s0] sm:$0xff]
    %v115 = vld [vmem:[%s0 + $0x8] sm:$0xff]
    %s116 = smul.u32 0, 128
    %v117 = vlaneseq
    %v118 = vand.u32 %v117, 127
    %v119 = vstv %s116
    %v120 = vadd.s32 %v119, %v118
    %vm121 = vcmp.lt.s32.totalorder %v120, 128
    %v122 = vsel %vm121, %v108, -1e+30
    %v123 = vsel %vm121, %v111, -1e+30
    %124 = vmax.xlane.f32.xlu0 %v122
    %v125 = vpop.xlane.xlu0 %124
    %126 = vmax.xlane.f32.xlu0 %v123
    %v127 = vpop.xlane.xlu0 %126
    %v128 = vld [vmem:[#allocation2] sm:$0xff]
    %v129 = vld [vmem:[#allocation2 + $0x8] sm:$0xff]
    %v130 = vmax.f32 %v128, %v125
    %v131 = vmax.f32 %v129, %v127
    %v132 = vld [vmem:[#allocation3] sm:$0xff]
    %v133 = vld [vmem:[#allocation3 + $0x8] sm:$0xff]
    %v134 = vsub.f32 %v128, %v130
    %v135 = vsub.f32 %v129, %v131
    %v136 = vmul.f32 %v134, 1.442695
    %v137 = vpow.pop %v136
    %v138 = vmul.f32 %v135, 1.442695
    %v139 = vpow.pop %v138
    %v140 = vmul.f32 %v132, %v137
    %v141 = vmul.f32 %v133, %v139
    %143 = vset.pattern.permute.xlu0 0
    %144 = vperm.xlu0 %143, %v130
    %v145 = vpop.permute.xlu0 %144
    %148 = vset.pattern.permute.xlu0 0
    %149 = vperm.xlu0 %148, %v131
    %v150 = vpop.permute.xlu0 %149
    %v152 = vsub.f32 %v122, %v145
    %v153 = vsub.f32 %v123, %v150
    %v154 = vmul.f32 %v152, 1.442695
    %v155 = vpow.pop %v154
    %v156 = vmul.f32 %v153, 1.442695
    %v157 = vpow.pop %v156
    %158 = vadd.xlane.f32.xlu0 %v155
    %v159 = vpop.xlane.xlu0 %158
    %160 = vadd.xlane.f32.xlu0 %v157
    %v161 = vpop.xlane.xlu0 %160
    %v162 = vadd.f32 %v140, %v159
    %v163 = vadd.f32 %v141, %v161
    %vm164 = vcmask 7168
    %165 = vst.msk [vmem:[#allocation3] sm:$0xff] %vm164, %v162
    %166 = vst.msk [vmem:[#allocation3 + $0x8] sm:$0xff] %vm164, %v163
    %167 = vst.msk [vmem:[#allocation2] sm:$0xff] %vm164, %v130
    %168 = vst.msk [vmem:[#allocation2 + $0x8] sm:$0xff] %vm164, %v131
    %v169 = vld [vmem:[#allocation4] sm:$0xff]
    %v170 = vld [vmem:[#allocation4 + $0x8] sm:$0xff]
    %171 = vset.pattern.permute.xlu0 0
    %172 = vperm.xlu0 %171, %v114
    %v173 = vpop.permute.xlu0 %172
    %174 = vset.pattern.permute.xlu0 0
    %175 = vperm.xlu0 %174, %v115
    %v176 = vpop.permute.xlu0 %175
    %vm177 = vcmp.eq.s32.totalorder %v120, %v173
    %vm178 = vcmp.eq.s32.totalorder %v120, %v176
    %v179 = vsel %vm177, %v122, 0.0
    %v180 = vsel %vm178, %v123, 0.0
    %181 = vadd.xlane.f32.xlu0 %v179
    %v182 = vpop.xlane.xlu0 %181
    %183 = vadd.xlane.f32.xlu0 %v180
    %v184 = vpop.xlane.xlu0 %183
    %v185 = vadd.f32 %v169, %v182
    %v186 = vadd.f32 %v170, %v184
    %187 = vst.msk [vmem:[#allocation4] sm:$0xff] %vm164, %v185
    %188 = vst.msk [vmem:[#allocation4 + $0x8] sm:$0xff] %vm164, %v186
    %vm189 = vcmp.eq.f32.partialorder %v122, %v125
    %vm190 = vcmp.eq.f32.partialorder %v123, %v127
    %v191 = vsel %vm189, %v120, 2147483647
    %v192 = vsel %vm190, %v120, 2147483647
    %v193 = vand.u32 %v191, 65535
    %v194 = vshra.s32 %v191, 16
    %v195 = vcvt.s32.f32 %v193
    %v196 = vcvt.s32.f32 %v194
    %197 = vmin.xlane.f32.xlu0 %v196
    %v198 = vpop.xlane.xlu0 %197
    %vm199 = vcmp.eq.f32.partialorder %v196, %v198
    %v200 = vsel %vm199, %v195, inf
    %201 = vmin.xlane.f32.xlu0 %v200
    %v202 = vpop.xlane.xlu0 %201
    %v203 = vcvt.f32.s32 %v202
    %v204 = vcvt.f32.s32 %v198
    %v205 = vshll.u32 %v204, 16
    %v206 = vadd.s32 %v205, %v203
    %v207 = vand.u32 %v192, 65535
    %v208 = vshra.s32 %v192, 16
    %v209 = vcvt.s32.f32 %v207
    %v210 = vcvt.s32.f32 %v208
    %211 = vmin.xlane.f32.xlu0 %v210
    %v212 = vpop.xlane.xlu0 %211
    %vm213 = vcmp.eq.f32.partialorder %v210, %v212
    %v214 = vsel %vm213, %v209, inf
    %215 = vmin.xlane.f32.xlu0 %v214
    %v216 = vpop.xlane.xlu0 %215
    %v217 = vcvt.f32.s32 %v216
    %v218 = vcvt.f32.s32 %v212
    %v219 = vshll.u32 %v218, 16
    %v220 = vadd.s32 %v219, %v217
    %v221 = vld [vmem:[#allocation5] sm:$0xff]
    %v222 = vld [vmem:[#allocation5 + $0x8] sm:$0xff]
    %vm223 = vcmp.gt.f32.partialorder %v125, %v221
    %vm224 = vcmp.gt.f32.partialorder %v127, %v222
    %v225 = vld [vmem:[#allocation6] sm:$0xff]
    %v226 = vld [vmem:[#allocation6 + $0x8] sm:$0xff]
    %v227 = vsel %vm223, %v206, %v225
    %v228 = vsel %vm224, %v220, %v226
    %229 = vst.msk [vmem:[#allocation6] sm:$0xff] %vm164, %v227
    %230 = vst.msk [vmem:[#allocation6 + $0x8] sm:$0xff] %vm164, %v228
    %v231 = vld [vmem:[#allocation5] sm:$0xff]
    %v232 = vld [vmem:[#allocation5 + $0x8] sm:$0xff]
    %v233 = vmax.f32 %v231, %v125
    %v234 = vmax.f32 %v232, %v127
    %235 = vst.msk [vmem:[#allocation5] sm:$0xff] %vm164, %v233
    %236 = vst.msk [vmem:[#allocation5 + $0x8] sm:$0xff] %vm164, %v234
    // Predicated region
    $region22: #{tpu_custom_call.1} parent=1 // pred_check
      %p237 = pneg %p31
    $region23: #{tpu_custom_call.1} parent=1 // pred_check_branch
      %239 = sbr.rel (%p237) target = $region25
    $region24: #{tpu_custom_call.1} parent=1 // pred_region
      %v240 = vld [vmem:[#allocation2] sm:$0xff]
      %v241 = vld [vmem:[#allocation2 + $0x8] sm:$0xff]
      %v242 = vld [vmem:[#allocation3] sm:$0xff]
      %v243 = vld [vmem:[#allocation3 + $0x8] sm:$0xff]
      %v244 = vlog2.pop %v242
      %v245 = vmul.f32 %v244, 0.6931472
      %v246 = vlog2.pop %v243
      %v247 = vmul.f32 %v246, 0.6931472
      %v248 = vadd.f32 %v240, %v245
      %v249 = vadd.f32 %v241, %v247
      %v250 = vld [vmem:[#allocation4] sm:$0xff]
      %v251 = vld [vmem:[#allocation4 + $0x8] sm:$0xff]
      %v252 = vsub.f32 %v248, %v250
      %v253 = vsub.f32 %v249, %v251
      %vm254 = vcmp.eq.s32.totalorder %v114, 4294967196
      %vm255 = vcmp.eq.s32.totalorder %v115, 4294967196
      %v256 = vsel %vm254, 0.0, %v252
      %v257 = vsel %vm255, 0.0, %v253
      %258 = vst.msk [vmem:[%s3] sm:$0xff] %vm164, %v256
      %259 = vst.msk [vmem:[%s3 + $0x8] sm:$0xff] %vm164, %v257
      %v260 = vld [vmem:[#allocation6] sm:$0xff]
      %v261 = vld [vmem:[#allocation6 + $0x8] sm:$0xff]
      %262 = vst.msk [vmem:[%s4] sm:$0xff] %vm164, %v260
      %263 = vst.msk [vmem:[%s4 + $0x8] sm:$0xff] %vm164, %v261
    $region25: #{tpu_custom_call.1} parent=1 // pred_fallthru
      _
    // Predicated region
    $region26: #{tpu_custom_call.1} parent=1 // pred_check
      _
    $region27: #{tpu_custom_call.1} parent=1 // pred_check_branch
      %265 = sbr.rel (0) target = $region29
    $region28: #{tpu_custom_call.1} parent=1 // pred_region
      _
    $region29: #{tpu_custom_call.1} parent=1 // pred_fallthru
      _
    // Predicated region
    $region30: #{tpu_custom_call.1} parent=1 // pred_check
      _
    $region31: #{tpu_custom_call.1} parent=1 // pred_check_branch
      %267 = sbr.rel (0) target = $region33
    $region32: #{tpu_custom_call.1} parent=1 // pred_region
      _
    $region33: #{tpu_custom_call.1} parent=1 // pred_fallthru
      _
    // Predicated region
    $region34: #{tpu_custom_call.1} parent=1 // pred_check
      _
    $region35: #{tpu_custom_call.1} parent=1 // pred_check_branch
      %269 = sbr.rel (0) target = $region37
    $region36: #{tpu_custom_call.1} parent=1 // pred_region
      _
    $region37: #{tpu_custom_call.1} parent=1 // pred_fallthru
      _
    // Predicated region
    $region38: #{tpu_custom_call.1} parent=1 // pred_check
      _
    $region39: #{tpu_custom_call.1} parent=1 // pred_check_branch
      %271 = sbr.rel (0) target = $region41
    $region40: #{tpu_custom_call.1} parent=1 // pred_region
      _
    $region41: #{tpu_custom_call.1} parent=1 // pred_fallthru
      _
    %272 = vsyncpa [#allocation8], 1

</llo_original>
